<compile_context>
chip_gen: v7x
topology: tpu7x:2x2x1
jax: 0.10.0
libtpu: 0.0.40
codegen_flags: <defaults>
</compile_context>

<pallas_src>
import jax
import jax.numpy as jnp
from jax.experimental import pallas as pl
from jax.experimental.pallas import tpu as pltpu


def se_weight_kernel(w1_ref, b1_ref, w2_ref, b2_ref, x_ref, o_ref, acc_ref):
    # w1_ref : VMEM (C, Ch)   fc1 weight, pre-transposed, pre-scaled by 1/(H*W)
    # b1_ref : VMEM (1, Ch)   fc1 bias
    # w2_ref : VMEM (C, Ch)   fc2 weight (PyTorch layout (C_out, C_in) already)
    # b2_ref : VMEM (C, 1)    fc2 bias
    # x_ref  : VMEM (1, C, tS) one spatial tile of one batch element (spatial dims flattened)
    # o_ref  : VMEM (1, C, 1)  output channel-attention weights for this batch element
    # acc_ref: VMEM (C, 1) f32 running spatial SUM per channel
    s = pl.program_id(1)

    @pl.when(s == 0)
    def _init():
        acc_ref[...] = jnp.zeros_like(acc_ref)

    # Spatial partial sum for this tile: (C, tS) -> (C, 1), accumulated in f32.
    xt = x_ref[0]
    acc_ref[...] += jnp.sum(xt, axis=-1, keepdims=True, dtype=jnp.float32)

    @pl.when(s == pl.num_programs(1) - 1)
    def _finalize():
        pooled = acc_ref[...]                       # (C, 1) spatial SUM (1/(H*W) folded in w1)
        # fc1 + ReLU: (C, Ch) * (C, 1) -> reduce over C -> (1, Ch)
        h = jnp.sum(w1_ref[...] * pooled, axis=0, keepdims=True) + b1_ref[...]
        h = jnp.maximum(h, 0.0)
        # fc2: (C, Ch) * (1, Ch) -> reduce over Ch -> (C, 1)
        o = jnp.sum(w2_ref[...] * h, axis=1, keepdims=True) + b2_ref[...]
        o_ref[0] = jax.nn.sigmoid(o).astype(o_ref.dtype)


def _pick_spatial_tile(S, C, itemsize, target_bytes=2 * 1024 * 1024):
    """Largest multiple-of-128 divisor of S that keeps a (C, tS) block around target_bytes."""
    cap = max(128, (target_bytes // max(1, C * itemsize)) // 128 * 128)
    if S <= cap:
        return S
    t = cap
    while t >= 128:
        if S % t == 0:
            return t
        t -= 128
    return S  # fallback: whole spatial extent in one block (still correct)


def se_weight(x, w1, b1, w2, b2):
    """SEWeightModule forward.

    x : (N, C, H, W)
    w1: (Ch, C, 1, 1)  fc1 = Conv2d(C, C // ratio, kernel_size=1) weight
    b1: (Ch,)          fc1 bias
    w2: (C, Ch, 1, 1)  fc2 = Conv2d(C // ratio, C, kernel_size=1) weight
    b2: (C,)           fc2 bias
    returns (N, C, 1, 1) channel-attention weights (same dtype as x).
    """
    N, C, H, W = x.shape
    Ch = w1.shape[0]
    S = H * W
    tS = _pick_spatial_tile(S, C, jnp.dtype(x.dtype).itemsize)
    n_s = S // tS

    # Host-side precompute (free): fold 1/(H*W) of the average pool into the fc1 weights and
    # lay both weight matrices out as (C, Ch) so the kernel needs no transposes.
    w1t = (w1.reshape(Ch, C).T / float(S)).astype(jnp.float32)   # (C, Ch)
    b1r = b1.reshape(1, Ch).astype(jnp.float32)                  # (1, Ch)
    w2m = w2.reshape(C, Ch).astype(jnp.float32)                  # (C, Ch)
    b2c = b2.reshape(C, 1).astype(jnp.float32)                   # (C, 1)

    x2 = x.reshape(N, C, S)                                      # lane-dense spatial axis

    out = pl.pallas_call(
        se_weight_kernel,
        out_shape=jax.ShapeDtypeStruct((N, C, 1), x.dtype),
        grid_spec=pltpu.PrefetchScalarGridSpec(
            num_scalar_prefetch=0,
            grid=(N, n_s),                                       # spatial reduction axis last
            in_specs=[
                pl.BlockSpec((C, Ch), lambda n, s: (0, 0)),       # fc1 weight (resident)
                pl.BlockSpec((1, Ch), lambda n, s: (0, 0)),       # fc1 bias
                pl.BlockSpec((C, Ch), lambda n, s: (0, 0)),       # fc2 weight
                pl.BlockSpec((C, 1), lambda n, s: (0, 0)),        # fc2 bias
                pl.BlockSpec((1, C, tS), lambda n, s: (n, 0, s)), # x spatial tile
            ],
            out_specs=pl.BlockSpec((1, C, 1), lambda n, s: (n, 0, 0)),
            scratch_shapes=[pltpu.VMEM((C, 1), jnp.float32)],     # per-channel sum accumulator
        ),
        compiler_params=pltpu.CompilerParams(
            dimension_semantics=("parallel", "arbitrary")),
    )(w1t, b1r, w2m, b2c, x2)

    return out.reshape(N, C, 1, 1)


def ref_forward(x, w1, b1, w2, b2):
    """Pure-JAX reference matching the PyTorch SEWeightModule exactly."""
    N, C, H, W = x.shape
    Ch = w1.shape[0]
    pooled = jnp.mean(x, axis=(2, 3))                            # (N, C)  AdaptiveAvgPool2d(1)
    h = jax.nn.relu(pooled @ w1.reshape(Ch, C).T + b1)           # fc1 (1x1 conv) + ReLU
    o = jax.nn.sigmoid(h @ w2.reshape(C, Ch).T + b2)             # fc2 (1x1 conv) + Sigmoid
    return o.reshape(N, C, 1, 1)


if __name__ == "__main__":
    key = jax.random.PRNGKey(0)
    kx, kw1, kb1, kw2, kb2 = jax.random.split(key, 5)

    N, C, H, W = 2, 32, 16, 16
    ratio = 8
    Ch = C // ratio

    x = jax.random.normal(kx, (N, C, H, W), dtype=jnp.float32)
    w1 = 0.1 * jax.random.normal(kw1, (Ch, C, 1, 1), dtype=jnp.float32)
    b1 = 0.1 * jax.random.normal(kb1, (Ch,), dtype=jnp.float32)
    w2 = 0.1 * jax.random.normal(kw2, (C, Ch, 1, 1), dtype=jnp.float32)
    b2 = 0.1 * jax.random.normal(kb2, (C,), dtype=jnp.float32)

    out = se_weight(x, w1, b1, w2, b2)
    jax.block_until_ready(out)

    ref = ref_forward(x, w1, b1, w2, b2)
    assert out.shape == (N, C, 1, 1)
    err = float(jnp.max(jnp.abs(out - ref)))
    assert jnp.allclose(out, ref, atol=1e-5, rtol=1e-5), err

    print("KERNEL_OK")
</pallas_src>

<mosaic_0001>
module attributes {stable_mosaic.version = 11 : i64} {
  func.func @se_weight_kernel(%arg0: i32, %arg1: i32, %arg2: memref<32x4xf32, #tpu.memory_space<vmem>>, %arg3: memref<1x4xf32, #tpu.memory_space<vmem>>, %arg4: memref<32x4xf32, #tpu.memory_space<vmem>>, %arg5: memref<32x1xf32, #tpu.memory_space<vmem>>, %arg6: memref<1x32x256xf32, #tpu.memory_space<vmem>>, %arg7: memref<1x32x1xf32, #tpu.memory_space<vmem>>, %arg8: memref<32x1xf32, #tpu.memory_space<vmem>>) attributes {dimension_semantics = [#tpu.dimension_semantics<parallel>, #tpu.dimension_semantics<arbitrary>], iteration_bounds = array<i64: 2, 1>, scalar_prefetch = 0 : i64, scratch_operands = 1 : i64, tpu.core_type = #tpu.core_type<tc>, window_params = [{pipeline_mode = #tpu.pipeline_mode<synchronous>, transform_indices = @transform_0, window_bounds = array<i64: 32, 4>}, {pipeline_mode = #tpu.pipeline_mode<synchronous>, transform_indices = @transform_1, window_bounds = array<i64: 1, 4>}, {pipeline_mode = #tpu.pipeline_mode<synchronous>, transform_indices = @transform_2, window_bounds = array<i64: 32, 4>}, {pipeline_mode = #tpu.pipeline_mode<synchronous>, transform_indices = @transform_3, window_bounds = array<i64: 32, 1>}, {transform_indices = @transform_4, window_bounds = array<i64: 1, 32, 256>}, {transform_indices = @transform_5, window_bounds = array<i64: 1, 32, 1>}]} {
    %c0_i32 = arith.constant 0 : i32
    %0 = arith.cmpi eq, %arg1, %c0_i32 : i32
    %1 = arith.extui %0 : i1 to i32
    %c0_i32_0 = arith.constant 0 : i32
    %2 = arith.cmpi ne, %1, %c0_i32_0 : i32
    scf.if %2 {
      %cst_9 = arith.constant 0.000000e+00 : f32
      %13 = vector.broadcast %cst_9 : f32 to vector<32x1xf32>
      %c0_10 = arith.constant 0 : index
      %c0_11 = arith.constant 0 : index
      %14 = vector.load %arg8[%c0_10, %c0_11] : memref<32x1xf32, #tpu.memory_space<vmem>>, vector<32x1xf32>
      tpu.vector_store %arg8[%c0_10, %c0_11], %13 {strides = array<i32>} : memref<32x1xf32, #tpu.memory_space<vmem>>, vector<32x1xf32>,
    } else {
    }
    %c0 = arith.constant 0 : index
    %c0_1 = arith.constant 0 : index
    %c0_2 = arith.constant 0 : index
    %3 = vector.load %arg6[%c0, %c0_1, %c0_2] : memref<1x32x256xf32, #tpu.memory_space<vmem>>, vector<1x32x256xf32>
    %4 = vector.shape_cast %3 : vector<1x32x256xf32> to vector<32x256xf32>
    %c0_3 = arith.constant 0 : index
    %c0_4 = arith.constant 0 : index
    %5 = vector.load %arg8[%c0_3, %c0_4] : memref<32x1xf32, #tpu.memory_space<vmem>>, vector<32x1xf32>
    %cst = arith.constant dense<0.000000e+00> : vector<32xf32>
    %6 = vector.multi_reduction <add>, %4, %cst [1] : vector<32x256xf32> to vector<32xf32>
    %7 = vector.shape_cast %6 : vector<32xf32> to vector<32x1xf32>
    %8 = arith.addf %5, %7 : vector<32x1xf32>
    %c0_5 = arith.constant 0 : index
    %c0_6 = arith.constant 0 : index
    %9 = vector.load %arg8[%c0_5, %c0_6] : memref<32x1xf32, #tpu.memory_space<vmem>>, vector<32x1xf32>
    tpu.vector_store %arg8[%c0_5, %c0_6], %8 {strides = array<i32>} : memref<32x1xf32, #tpu.memory_space<vmem>>, vector<32x1xf32>,
    %c0_i32_7 = arith.constant 0 : i32
    %10 = arith.cmpi eq, %arg1, %c0_i32_7 : i32
    %11 = arith.extui %10 : i1 to i32
    %c0_i32_8 = arith.constant 0 : i32
    %12 = arith.cmpi ne, %11, %c0_i32_8 : i32
    scf.if %12 {
      %c0_9 = arith.constant 0 : index
      %c0_10 = arith.constant 0 : index
      %13 = vector.load %arg8[%c0_9, %c0_10] : memref<32x1xf32, #tpu.memory_space<vmem>>, vector<32x1xf32>
      %c0_11 = arith.constant 0 : index
      %c0_12 = arith.constant 0 : index
      %14 = vector.load %arg2[%c0_11, %c0_12] : memref<32x4xf32, #tpu.memory_space<vmem>>, vector<32x4xf32>
      %15 = vector.broadcast %13 : vector<32x1xf32> to vector<32x4xf32>
      %16 = arith.mulf %14, %15 : vector<32x4xf32>
      %cst_13 = arith.constant dense<0.000000e+00> : vector<4xf32>
      %17 = vector.multi_reduction <add>, %16, %cst_13 [0] : vector<32x4xf32> to vector<4xf32>
      %18 = vector.shape_cast %17 : vector<4xf32> to vector<1x4xf32>
      %c0_14 = arith.constant 0 : index
      %c0_15 = arith.constant 0 : index
      %19 = vector.load %arg3[%c0_14, %c0_15] : memref<1x4xf32, #tpu.memory_space<vmem>>, vector<1x4xf32>
      %20 = arith.addf %18, %19 : vector<1x4xf32>
      %cst_16 = arith.constant 0.000000e+00 : f32
      %21 = vector.broadcast %cst_16 : f32 to vector<1x4xf32>
      %22 = arith.maximumf %20, %21 : vector<1x4xf32>
      %c0_17 = arith.constant 0 : index
      %c0_18 = arith.constant 0 : index
      %23 = vector.load %arg4[%c0_17, %c0_18] : memref<32x4xf32, #tpu.memory_space<vmem>>, vector<32x4xf32>
      %24 = vector.broadcast %22 : vector<1x4xf32> to vector<32x4xf32>
      %25 = arith.mulf %23, %24 : vector<32x4xf32>
      %cst_19 = arith.constant dense<0.000000e+00> : vector<32xf32>
      %26 = vector.multi_reduction <add>, %25, %cst_19 [1] : vector<32x4xf32> to vector<32xf32>
      %27 = vector.shape_cast %26 : vector<32xf32> to vector<32x1xf32>
      %c0_20 = arith.constant 0 : index
      %c0_21 = arith.constant 0 : index
      %28 = vector.load %arg5[%c0_20, %c0_21] : memref<32x1xf32, #tpu.memory_space<vmem>>, vector<32x1xf32>
      %29 = arith.addf %27, %28 : vector<32x1xf32>
      %30 = arith.negf %29 : vector<32x1xf32>
      %31 = math.exp %30 : vector<32x1xf32>
      %cst_22 = arith.constant 1.000000e+00 : f32
      %32 = vector.broadcast %cst_22 : f32 to vector<32x1xf32>
      %33 = arith.addf %32, %31 : vector<32x1xf32>
      %34 = arith.divf %32, %33 : vector<32x1xf32>
      %c0_23 = arith.constant 0 : index
      %c0_24 = arith.constant 0 : index
      %c0_25 = arith.constant 0 : index
      %35 = vector.load %arg7[%c0_23, %c0_24, %c0_25] : memref<1x32x1xf32, #tpu.memory_space<vmem>>, vector<1x32x1xf32>
      %36 = vector.shape_cast %35 : vector<1x32x1xf32> to vector<32x1xf32>
      %37 = vector.shape_cast %34 : vector<32x1xf32> to vector<1x32x1xf32>
      tpu.vector_store %arg7[%c0_23, %c0_24, %c0_25], %37 {strides = array<i32>} : memref<1x32x1xf32, #tpu.memory_space<vmem>>, vector<1x32x1xf32>,
    } else {
    }
    return
  }
  func.func @transform_0(%arg0: i32, %arg1: i32) -> (i32, i32) {
    %c0_i32 = arith.constant 0 : i32
    %c0_i32_0 = arith.constant 0 : i32
    %c0_i32_1 = arith.constant 0 : i32
    return %c0_i32, %c0_i32_0 : i32, i32
  }
  func.func @transform_1(%arg0: i32, %arg1: i32) -> (i32, i32) {
    %c0_i32 = arith.constant 0 : i32
    %c0_i32_0 = arith.constant 0 : i32
    %c0_i32_1 = arith.constant 0 : i32
    return %c0_i32, %c0_i32_0 : i32, i32
  }
  func.func @transform_2(%arg0: i32, %arg1: i32) -> (i32, i32) {
    %c0_i32 = arith.constant 0 : i32
    %c0_i32_0 = arith.constant 0 : i32
    %c0_i32_1 = arith.constant 0 : i32
    return %c0_i32, %c0_i32_0 : i32, i32
  }
  func.func @transform_3(%arg0: i32, %arg1: i32) -> (i32, i32) {
    %c0_i32 = arith.constant 0 : i32
    %c0_i32_0 = arith.constant 0 : i32
    %c0_i32_1 = arith.constant 0 : i32
    return %c0_i32, %c0_i32_0 : i32, i32
  }
  func.func @transform_4(%arg0: i32, %arg1: i32) -> (i32, i32, i32) {
    %c0_i32 = arith.constant 0 : i32
    %c0_i32_0 = arith.constant 0 : i32
    return %arg0, %c0_i32, %arg1 : i32, i32, i32
  }
  func.func @transform_5(%arg0: i32, %arg1: i32) -> (i32, i32, i32) {
    %c0_i32 = arith.constant 0 : i32
    %c0_i32_0 = arith.constant 0 : i32
    %c0_i32_1 = arith.constant 0 : i32
    return %arg0, %c0_i32, %c0_i32_0 : i32, i32, i32
  }
}

</mosaic_0001>

<llo_original>
// kernel: tpu_custom_call.1
$region0: #{tpu_custom_call.1}
  #allocation0 [shape = 'u32[]', space=smem, size = 0x4, offset = 0x4, fixed_abs, tag = 'smem constant byte address 0x4 - core index']
  #allocation1 [shape = 'u32[144,128]{1,0:T(1,128)}', space=vmem, size = 0x12000, scoped, tag = 'internal scratch']
  #allocation2 [shape = 'f32[32,1]{1,0:T(8,128)}', space=vmem, size = 0x4000, scoped, tag = 'scratch operand']
  %s0 = inlined_call_operand.vmem [shape: f32[32,4], index: 0, kind: input, shape index: {}]
  %s1 = inlined_call_operand.vmem [shape: f32[1,4], index: 1, kind: input, shape index: {}]
  %s2 = inlined_call_operand.vmem [shape: f32[32,4], index: 2, kind: input, shape index: {}]
  %s3 = inlined_call_operand.vmem [shape: f32[32,1], index: 3, kind: input, shape index: {}]
  %s4 = inlined_call_operand.hbm [shape: f32[2,32,256], index: 4, kind: input, shape index: {}]
  %s5 = inlined_call_operand.vmem [shape: f32[2,32,1], index: 5, kind: output, shape index: {}]
  %s6 = sld [smem:[#allocation0]]
  $region65: #{tpu_custom_call.1} parent=0
    _
  %s8 = ssub.s32 1, %s6
  %s9 = scalar_select 0, %s8, %s6
  $region1: #{tpu_custom_call.1} parent=0
    #allocation3 [shape = 'u8[65536]{0}', space=vmem, size = 0x10000, scoped, tag = 'input window, operand 4']
    #allocation4 [shape = 's32[2]{0}', space=sflag, size = 0x8, scoped, tag = 'scoped memory for tpu_custom_call.1']
    %10 = vsyncpa [#allocation4], 0
    %s11 = scalar_lea.sflag [#allocation4], 1
    %12 = vsyncpa %s11, 0
    loop: start=0, step=1, limit=4
    $region2: #{tpu_custom_call.1} parent=1 // loop_pre_header
      _
    $region3: #{tpu_custom_call.1} parent=1 // loop_header
      %s14 = sphi 0, %s18
      %p15 = scmp.ge.s32.totalorder %s14, 4
      %s21 = sphi 0, %s33
      %s22 = sphi 0, %s29
      %s23 = sphi 0, %s21
      %s24 = sphi 0, %s22
      %s25 = sphi 0, %s23
      %s26 = sphi 0, %s24
      %s34 = sphi 0, %s34
      %s36 = sphi 0, %s34
      %s37 = sphi 0, %s36
      %s51 = sphi 0, %s37
      %s55 = sphi 0, %s55
      %s57 = sphi 0, %s55
      %s58 = sphi 0, %s57
      %s72 = sphi 0, %s58
      %s76 = sphi 0, %s76
      %s78 = sphi 0, %s76
      %s79 = sphi 0, %s78
      %s93 = sphi 0, %s79
      %s97 = sphi 0, %s97
      %s99 = sphi 0, %s97
      %s100 = sphi 0, %s99
      %s114 = sphi 0, %s100
      %s122 = sphi 0, %s124
      %s125 = sphi 0, %s122
      %s126 = sphi 0, %s125
      %s142 = sphi 0, %s126
      %s148 = sphi 0, %s150
      %s151 = sphi 0, %s148
      %s152 = sphi 0, %s151
      %s168 = sphi 0, %s152
    $region4: #{tpu_custom_call.1} parent=1 // loop_header_branch
      %17 = sbr.rel (%p15) target = $region8
    $region5: #{tpu_custom_call.1} parent=1 // loop_body
      %s19 = ssub.s32 %s14, 1
      %s20 = ssub.s32 %s14, 2
      %s27 = sadd.s32 1, %s22
      %p28 = scmp.ge.s32.totalorder %s27, 1
      %s29 = scalar_select %p28, 0, %s27
      %s30 = sadd.s32 1, %s21
      %s31 = scalar_select %p28, %s30, %s21
      %p32 = scmp.ge.s32.totalorder %s31, 2
      %s33 = scalar_select %p32, 0, %s31
      %s35 = sadd.s32 %s34, 1
      %p38 = scmp.eq.s32.totalorder %s14, 1
      %p39 = scmp.ne.s32.totalorder %s34, %s36
      %p40 = scmp.eq.s32.totalorder %s14, 0
      %p41 = por %p39, %p40
      %p42 = scmp.ne.s32.totalorder %s34, %s36
      %p43 = scmp.eq.s32.totalorder %s19, 1
      %p44 = por %p42, %p43
      %p45 = scmp.ne.s32.totalorder %s36, %s37
      %p46 = scmp.eq.s32.totalorder %s19, 0
      %p47 = por %p45, %p46
      %p48 = scmp.ne.s32.totalorder %s36, %s37
      %p49 = scmp.eq.s32.totalorder %s20, 1
      %p50 = por %p48, %p49
      %p52 = scmp.ne.s32.totalorder %s37, %s51
      %p53 = scmp.eq.s32.totalorder %s20, 0
      %p54 = por %p52, %p53
      %s56 = sadd.s32 %s55, 1
      %p59 = scmp.eq.s32.totalorder %s14, 1
      %p60 = scmp.ne.s32.totalorder %s55, %s57
      %p61 = scmp.eq.s32.totalorder %s14, 0
      %p62 = por %p60, %p61
      %p63 = scmp.ne.s32.totalorder %s55, %s57
      %p64 = scmp.eq.s32.totalorder %s19, 1
      %p65 = por %p63, %p64
      %p66 = scmp.ne.s32.totalorder %s57, %s58
      %p67 = scmp.eq.s32.totalorder %s19, 0
      %p68 = por %p66, %p67
      %p69 = scmp.ne.s32.totalorder %s57, %s58
      %p70 = scmp.eq.s32.totalorder %s20, 1
      %p71 = por %p69, %p70
      %p73 = scmp.ne.s32.totalorder %s58, %s72
      %p74 = scmp.eq.s32.totalorder %s20, 0
      %p75 = por %p73, %p74
      %s77 = sadd.s32 %s76, 1
      %p80 = scmp.eq.s32.totalorder %s14, 1
      %p81 = scmp.ne.s32.totalorder %s76, %s78
      %p82 = scmp.eq.s32.totalorder %s14, 0
      %p83 = por %p81, %p82
      %p84 = scmp.ne.s32.totalorder %s76, %s78
      %p85 = scmp.eq.s32.totalorder %s19, 1
      %p86 = por %p84, %p85
      %p87 = scmp.ne.s32.totalorder %s78, %s79
      %p88 = scmp.eq.s32.totalorder %s19, 0
      %p89 = por %p87, %p88
      %p90 = scmp.ne.s32.totalorder %s78, %s79
      %p91 = scmp.eq.s32.totalorder %s20, 1
      %p92 = por %p90, %p91
      %p94 = scmp.ne.s32.totalorder %s79, %s93
      %p95 = scmp.eq.s32.totalorder %s20, 0
      %p96 = por %p94, %p95
      %s98 = sadd.s32 %s97, 1
      %p101 = scmp.eq.s32.totalorder %s14, 1
      %p102 = scmp.ne.s32.totalorder %s97, %s99
      %p103 = scmp.eq.s32.totalorder %s14, 0
      %p104 = por %p102, %p103
      %p105 = scmp.ne.s32.totalorder %s97, %s99
      %p106 = scmp.eq.s32.totalorder %s19, 1
      %p107 = por %p105, %p106
      %p108 = scmp.ne.s32.totalorder %s99, %s100
      %p109 = scmp.eq.s32.totalorder %s19, 0
      %p110 = por %p108, %p109
      %p111 = scmp.ne.s32.totalorder %s99, %s100
      %p112 = scmp.eq.s32.totalorder %s20, 1
      %p113 = por %p111, %p112
      %p115 = scmp.ne.s32.totalorder %s100, %s114
      %p116 = scmp.eq.s32.totalorder %s20, 0
      %p117 = por %p115, %p116
      %s118 = ssub.s32 %s21, %s33
      %s119 = ssub.s32 %s22, %s29
      %s120 = sor.u32 %s118, %s119
      %p121 = scmp.eq.s32.totalorder %s120, 0
      %s123 = sadd.s32 %s122, 1
      %s124 = scalar_select %p121, %s122, %s123
      %p127 = pneg %p121
      %p128 = scmp.eq.s32.totalorder %s14, 1
      %p129 = por %p127, %p128
      %p130 = scmp.ne.s32.totalorder %s122, %s125
      %p131 = scmp.eq.s32.totalorder %s14, 0
      %p132 = por %p130, %p131
      %p133 = scmp.ne.s32.totalorder %s122, %s125
      %p134 = scmp.eq.s32.totalorder %s19, 1
      %p135 = por %p133, %p134
      %p136 = scmp.ne.s32.totalorder %s125, %s126
      %p137 = scmp.eq.s32.totalorder %s19, 0
      %p138 = por %p136, %p137
      %p139 = scmp.ne.s32.totalorder %s125, %s126
      %p140 = scmp.eq.s32.totalorder %s20, 1
      %p141 = por %p139, %p140
      %p143 = scmp.ne.s32.totalorder %s126, %s142
      %p144 = scmp.eq.s32.totalorder %s20, 0
      %p145 = por %p143, %p144
      %s146 = ssub.s32 %s21, %s33
      %p147 = scmp.eq.s32.totalorder %s146, 0
      %s149 = sadd.s32 %s148, 1
      %s150 = scalar_select %p147, %s148, %s149
      %p153 = pneg %p147
      %p154 = scmp.eq.s32.totalorder %s14, 1
      %p155 = por %p153, %p154
      %p156 = scmp.ne.s32.totalorder %s148, %s151
      %p157 = scmp.eq.s32.totalorder %s14, 0
      %p158 = por %p156, %p157
      %p159 = scmp.ne.s32.totalorder %s148, %s151
      %p160 = scmp.eq.s32.totalorder %s19, 1
      %p161 = por %p159, %p160
      %p162 = scmp.ne.s32.totalorder %s151, %s152
      %p163 = scmp.eq.s32.totalorder %s19, 0
      %p164 = por %p162, %p163
      %p165 = scmp.ne.s32.totalorder %s151, %s152
      %p166 = scmp.eq.s32.totalorder %s20, 1
      %p167 = por %p165, %p166
      %p169 = scmp.ne.s32.totalorder %s152, %s168
      %p170 = scmp.eq.s32.totalorder %s20, 0
      %p171 = por %p169, %p170
      %p172 = scmp.le.s32.totalorder 1, %s14
      %p173 = scmp.lt.s32.totalorder %s14, 3
      %p174 = pnand %p172, %p173
      %p175 = pneg %p174
      // Predicated region
      $region9: #{tpu_custom_call.1} parent=5 // pred_check
        _
      $region10: #{tpu_custom_call.1} parent=5 // pred_check_branch
        %177 = sbr.rel (%p174) target = $region12
      $region11: #{tpu_custom_call.1} parent=5 // pred_region
        %s178 = ssub.s32 %s14, 1
        // Predicated region
        $region13: #{tpu_custom_call.1} parent=11 // pred_check
          %p179 = pneg %p47
        $region14: #{tpu_custom_call.1} parent=11 // pred_check_branch
          %181 = sbr.rel (%p179) target = $region16
        $region15: #{tpu_custom_call.1} parent=11 // pred_region
          _
        $region16: #{tpu_custom_call.1} parent=11 // pred_fallthru
          _
        // Predicated region
        $region17: #{tpu_custom_call.1} parent=11 // pred_check
          %p182 = pneg %p68
        $region18: #{tpu_custom_call.1} parent=11 // pred_check_branch
          %184 = sbr.rel (%p182) target = $region20
        $region19: #{tpu_custom_call.1} parent=11 // pred_region
          _
        $region20: #{tpu_custom_call.1} parent=11 // pred_fallthru
          _
        // Predicated region
        $region21: #{tpu_custom_call.1} parent=11 // pred_check
          %p185 = pneg %p89
        $region22: #{tpu_custom_call.1} parent=11 // pred_check_branch
          %187 = sbr.rel (%p185) target = $region24
        $region23: #{tpu_custom_call.1} parent=11 // pred_region
          _
        $region24: #{tpu_custom_call.1} parent=11 // pred_fallthru
          _
        // Predicated region
        $region25: #{tpu_custom_call.1} parent=11 // pred_check
          %p188 = pneg %p110
        $region26: #{tpu_custom_call.1} parent=11 // pred_check_branch
          %190 = sbr.rel (%p188) target = $region28
        $region27: #{tpu_custom_call.1} parent=11 // pred_region
          _
        $region28: #{tpu_custom_call.1} parent=11 // pred_fallthru
          _
      $region12: #{tpu_custom_call.1} parent=5 // pred_fallthru
        _
      %p191 = scmp.lt.s32.totalorder %s14, 2
      // Predicated region
      $region29: #{tpu_custom_call.1} parent=5 // pred_check
        %p192 = pneg %p191
      $region30: #{tpu_custom_call.1} parent=5 // pred_check_branch
        %194 = sbr.rel (%p192) target = $region32
      $region31: #{tpu_custom_call.1} parent=5 // pred_region
        // Predicated region
        $region33: #{tpu_custom_call.1} parent=31 // pred_check
          %p195 = pneg %p132
        $region34: #{tpu_custom_call.1} parent=31 // pred_check_branch
          %197 = sbr.rel (%p195) target = $region36
        $region35: #{tpu_custom_call.1} parent=31 // pred_region
          %s198 = sand.u32 %s122, 1
          %s199 = scalar_lea.sflag [#allocation4], %s198
          %s200 = sand.u32 %s122, 1
          %s201 = smul.addr %s200, 64
          %s202 = scalar_lea.vmem [#allocation3], %s201
          %s203 = smul.u32 2, %s22
          %s205 = ssub.s32 1024, 1024
          %206 = vsyncadd %s199, %s205
          %s207 = smul.addr %s21, 8
          %s208 = sadd.s32 %s203, %s207
          %s209 = smul.addr %s208, 128
          %s210 = scalar_lea.hbm %s4, %s209
          %s211 = sshll.u32 %s202, 4
          %s212 = int_to_ptr.vmem [resolvable:$true] %s211
          %217 = dma.hbm_to_vmem [thread:$0]  %s210, 1024, %s212, %s199, 256, 256, 16
        $region36: #{tpu_custom_call.1} parent=31 // pred_fallthru
          _
      $region32: #{tpu_custom_call.1} parent=5 // pred_fallthru
        _
      %p218 = scmp.le.s32.totalorder 1, %s14
      %p219 = scmp.lt.s32.totalorder %s14, 3
      %p220 = pnand %p218, %p219
      %p221 = pneg %p220
      // Predicated region
      $region37: #{tpu_custom_call.1} parent=5 // pred_check
        _
      $region38: #{tpu_custom_call.1} parent=5 // pred_check_branch
        %223 = sbr.rel (%p220) target = $region40
      $region39: #{tpu_custom_call.1} parent=5 // pred_region
        %s224 = ssub.s32 %s14, 1
        %s225 = sand.u32 %s125, 1
        %s226 = scalar_lea.sflag [#allocation4], %s225
        %s227 = sand.u32 %s125, 1
        %s228 = smul.addr %s227, 64
        %s229 = scalar_lea.vmem [#allocation3], %s228
        // Predicated region
        $region41: #{tpu_custom_call.1} parent=39 // pred_check
          %p230 = pneg %p138
        $region42: #{tpu_custom_call.1} parent=39 // pred_check_branch
          %232 = sbr.rel (%p230) target = $region44
        $region43: #{tpu_custom_call.1} parent=39 // pred_region
          %233 = dma.done %s226, 1024
        $region44: #{tpu_custom_call.1} parent=39 // pred_fallthru
          _
        %p234 = pneg %p47
        %p235 = pneg %p44
        %p236 = pneg %p68
        %p237 = pneg %p65
        %p238 = pneg %p89
        %p239 = pneg %p86
        %p240 = pneg %p110
        %p241 = pneg %p107
        %s242 = sand.u32 %s125, 1
        %s243 = scalar_lea.sflag [#allocation4], %s242
        %s244 = sand.u32 %s125, 1
        %s245 = smul.addr %s244, 64
        %s246 = scalar_lea.vmem [#allocation3], %s245
        %p247 = pneg %p138
        %p248 = pneg %p135
        %p249 = pneg %p164
        %p250 = pneg %p161
        %p251 = scmp.lt.s32.totalorder %s23, 1
        %s252 = scalar_select %p251, %s23, 1
        %s253 = smul.addr %s252, 4
        %s254 = smul.addr %s253, 8
        %s255 = scalar_lea.vmem %s5, %s254
        %s256 = smul.u32 2, %s24
        %p257 = scmp.lt.s32.totalorder %s23, 1
        %s258 = scalar_select %p257, %s23, 1
        %s259 = smul.addr %s258, 4
        %s260 = smul.addr %s259, 8
        %s261 = scalar_lea.vmem %s5, %s260
        %p262 = scmp.eq.s32.totalorder %s24, 0
        // Predicated region
        $region45: #{tpu_custom_call.1} parent=39 // pred_check
          %p263 = pneg %p262
        $region46: #{tpu_custom_call.1} parent=39 // pred_check_branch
          %265 = sbr.rel (%p263) target = $region48
        $region47: #{tpu_custom_call.1} parent=39 // pred_region
          %vm266 = vcmask 7168
          %267 = vst.msk [vmem:[#allocation2] sm:$0xff] %vm266, 0.0
          %268 = vst.msk [vmem:[#allocation2 + $0x8] sm:$0xff] %vm266, 0.0
          %269 = vst.msk [vmem:[#allocation2 + $0x10] sm:$0xff] %vm266, 0.0
          %270 = vst.msk [vmem:[#allocation2 + $0x18] sm:$0xff] %vm266, 0.0
        $region48: #{tpu_custom_call.1} parent=39 // pred_fallthru
          _
        %v271 = vld [vmem:[%s229] sm:$0xff]
        %v272 = vld [vmem:[%s229 + $0x8] sm:$0xff]
        %v273 = vld [vmem:[%s229 + $0x10] sm:$0xff]
        %v274 = vld [vmem:[%s229 + $0x18] sm:$0xff]
        %v275 = vld [vmem:[%s229 + $0x20] sm:$0xff]
        %v276 = vld [vmem:[%s229 + $0x28] sm:$0xff]
        %v277 = vld [vmem:[%s229 + $0x30] sm:$0xff]
        %v278 = vld [vmem:[%s229 + $0x38] sm:$0xff]
        %v279 = vld [vmem:[#allocation2] sm:$0xff]
        %v280 = vld [vmem:[#allocation2 + $0x8] sm:$0xff]
        %v281 = vld [vmem:[#allocation2 + $0x10] sm:$0xff]
        %v282 = vld [vmem:[#allocation2 + $0x18] sm:$0xff]
        %v283 = vadd.f32 %v271, %v272
        %284 = vadd.xlane.f32.xlu0 %v283
        %v285 = vpop.xlane.xlu0 %284
        %v286 = vadd.f32 %v273, %v274
        %287 = vadd.xlane.f32.xlu0 %v286
        %v288 = vpop.xlane.xlu0 %287
        %v289 = vadd.f32 %v275, %v276
        %290 = vadd.xlane.f32.xlu0 %v289
        %v291 = vpop.xlane.xlu0 %290
        %v292 = vadd.f32 %v277, %v278
        %293 = vadd.xlane.f32.xlu0 %v292
        %v294 = vpop.xlane.xlu0 %293
        %v295 = vadd.f32 %v279, %v285
        %v296 = vadd.f32 %v280, %v288
        %v297 = vadd.f32 %v281, %v291
        %v298 = vadd.f32 %v282, %v294
        %vm299 = vcmask 7168
        %300 = vst.msk [vmem:[#allocation2] sm:$0xff] %vm299, %v295
        %301 = vst.msk [vmem:[#allocation2 + $0x8] sm:$0xff] %vm299, %v296
        %302 = vst.msk [vmem:[#allocation2 + $0x10] sm:$0xff] %vm299, %v297
        %303 = vst.msk [vmem:[#allocation2 + $0x18] sm:$0xff] %vm299, %v298
        // Predicated region
        $region49: #{tpu_custom_call.1} parent=39 // pred_check
          %p304 = pneg %p262
        $region50: #{tpu_custom_call.1} parent=39 // pred_check_branch
          %306 = sbr.rel (%p304) target = $region52
        $region51: #{tpu_custom_call.1} parent=39 // pred_region
          %v307 = vld [vmem:[#allocation2] sm:$0xff]
          %v308 = vld [vmem:[#allocation2 + $0x8] sm:$0xff]
          %v309 = vld [vmem:[#allocation2 + $0x10] sm:$0xff]
          %v310 = vld [vmem:[#allocation2 + $0x18] sm:$0xff]
          %v311 = vld [vmem:[%s0] sm:$0xff]
          %v312 = vld [vmem:[%s0 + $0x8] sm:$0xff]
          %v313 = vld [vmem:[%s0 + $0x10] sm:$0xff]
          %v314 = vld [vmem:[%s0 + $0x18] sm:$0xff]
          %316 = vset.pattern.permute.xlu0 0
          %317 = vperm.xlu0 %316, %v307
          %v318 = vpop.permute.xlu0 %317
          %321 = vset.pattern.permute.xlu0 0
          %322 = vperm.xlu0 %321, %v308
          %v323 = vpop.permute.xlu0 %322
          %326 = vset.pattern.permute.xlu0 0
          %327 = vperm.xlu0 %326, %v309
          %v328 = vpop.permute.xlu0 %327
          %331 = vset.pattern.permute.xlu0 0
          %332 = vperm.xlu0 %331, %v310
          %v333 = vpop.permute.xlu0 %332
          %v335 = vmul.f32 %v311, %v318
          %v336 = vmul.f32 %v312, %v323
          %v337 = vmul.f32 %v313, %v328
          %v338 = vmul.f32 %v314, %v333
          %vm339 = vcmask 31744
          %v340 = vsel %vm339, %v335, 0.0
          %v341 = vsel %vm339, %v336, 0.0
          %v342 = vadd.f32 %v340, %v341
          %v343 = vsel %vm339, %v337, 0.0
          %v344 = vadd.f32 %v342, %v343
          %v345 = vsel %vm339, %v338, 0.0
          %v346 = vadd.f32 %v344, %v345
          %v347 = vrot.slane %v346, 4
          %v348 = vadd.f32 %v346, %v347
          %v349 = vrot.slane %v348, 2
          %v350 = vadd.f32 %v348, %v349
          %v351 = vrot.slane %v350, 1
          %v352 = vadd.f32 %v350, %v351
          %v353 = vld [vmem:[%s1] sm:$0x1]
          %v354 = vadd.f32 %v352, %v353
          %v355 = vmax.f32 %v354, 0.0
          %v356 = vld [vmem:[%s2] sm:$0xff]
          %v357 = vld [vmem:[%s2 + $0x8] sm:$0xff]
          %v358 = vld [vmem:[%s2 + $0x10] sm:$0xff]
          %v359 = vld [vmem:[%s2 + $0x18] sm:$0xff]
          %v360 = vlaneseq
          %v361 = vshrl.u32 %v360, 7
          %v362 = vsub.s32 0, %v361
          %v363 = vrot.slane %v355, %v362
          %v364 = vmul.f32 %v356, %v363
          %v365 = vmul.f32 %v357, %v363
          %v366 = vmul.f32 %v358, %v363
          %v367 = vmul.f32 %v359, %v363
          %v368 = vsel %vm339, %v364, 0.0
          %369 = vadd.xlane.f32.xlu0 %v368
          %v370 = vpop.xlane.xlu0 %369
          %v371 = vsel %vm339, %v365, 0.0
          %372 = vadd.xlane.f32.xlu0 %v371
          %v373 = vpop.xlane.xlu0 %372
          %v374 = vsel %vm339, %v366, 0.0
          %375 = vadd.xlane.f32.xlu0 %v374
          %v376 = vpop.xlane.xlu0 %375
          %v377 = vsel %vm339, %v367, 0.0
          %378 = vadd.xlane.f32.xlu0 %v377
          %v379 = vpop.xlane.xlu0 %378
          %v380 = vld [vmem:[%s3] sm:$0xff]
          %v381 = vld [vmem:[%s3 + $0x8] sm:$0xff]
          %v382 = vld [vmem:[%s3 + $0x10] sm:$0xff]
          %v383 = vld [vmem:[%s3 + $0x18] sm:$0xff]
          %v384 = vadd.f32 %v370, %v380
          %v385 = vadd.f32 %v373, %v381
          %v386 = vadd.f32 %v376, %v382
          %v387 = vadd.f32 %v379, %v383
          %v388 = vxor.u32 %v384, 2147483648
          %v389 = vxor.u32 %v385, 2147483648
          %v390 = vxor.u32 %v386, 2147483648
          %v391 = vxor.u32 %v387, 2147483648
          %v392 = vmul.f32 %v388, 1.442695
          %v393 = vpow.pop %v392
          %v394 = vmul.f32 %v389, 1.442695
          %v395 = vpow.pop %v394
          %v396 = vmul.f32 %v390, 1.442695
          %v397 = vpow.pop %v396
          %v398 = vmul.f32 %v391, 1.442695
          %v399 = vpow.pop %v398
          %v400 = vadd.f32 %v393, 1.0
          %v401 = vadd.f32 %v395, 1.0
          %v402 = vadd.f32 %v397, 1.0
          %v403 = vadd.f32 %v399, 1.0
          %v404 = vrcp.pop %v400
          %v405 = vmul.f32 1.0, %v404
          %v406 = vrcp.pop %v401
          %v407 = vmul.f32 1.0, %v406
          %v408 = vrcp.pop %v402
          %v409 = vmul.f32 1.0, %v408
          %v410 = vrcp.pop %v403
          %v411 = vmul.f32 1.0, %v410
          %412 = vst.msk [vmem:[%s261] sm:$0xff] %vm299, %v405
          %413 = vst.msk [vmem:[%s261 + $0x8] sm:$0xff] %vm299, %v407
          %414 = vst.msk [vmem:[%s261 + $0x10] sm:$0xff] %vm299, %v409
          %415 = vst.msk [vmem:[%s261 + $0x18] sm:$0xff] %vm299, %v411
        $region52: #{tpu_custom_call.1} parent=39 // pred_fallthru
          _
        %p416 = scmp.lt.s32.totalorder %s23, 1
        %s417 = scalar_select %p416, %s23, 1
        %s418 = smul.addr %s417, 4
        %s419 = smul.addr %s418, 8
        %s420 = scalar_lea.vmem %s5, %s419
        // Predicated region
        $region53: #{tpu_custom_call.1} parent=39 // pred_check
          %p421 = pneg %p161
        $region54: #{tpu_custom_call.1} parent=39 // pred_check_branch
          %423 = sbr.rel (%p421) target = $region56
        $region55: #{tpu_custom_call.1} parent=39 // pred_region
          _
        $region56: #{tpu_custom_call.1} parent=39 // pred_fallthru
          _
      $region40: #{tpu_custom_call.1} parent=5 // pred_fallthru
        _
      %p424 = scmp.le.s32.totalorder 2, %s14
      // Predicated region
      $region57: #{tpu_custom_call.1} parent=5 // pred_check
        %p425 = pneg %p424
      $region58: #{tpu_custom_call.1} parent=5 // pred_check_branch
        %427 = sbr.rel (%p425) target = $region60
      $region59: #{tpu_custom_call.1} parent=5 // pred_region
        %s428 = ssub.s32 %s14, 2
        // Predicated region
        $region61: #{tpu_custom_call.1} parent=59 // pred_check
          %p429 = pneg %p167
        $region62: #{tpu_custom_call.1} parent=59 // pred_check_branch
          %431 = sbr.rel (%p429) target = $region64
        $region63: #{tpu_custom_call.1} parent=59 // pred_region
          %p432 = scmp.lt.s32.totalorder %s25, 1
          %s433 = scalar_select %p432, %s25, 1
          %s434 = smul.addr %s433, 4
          %s435 = smul.addr %s434, 8
          %s436 = scalar_lea.vmem %s5, %s435
        $region64: #{tpu_custom_call.1} parent=59 // pred_fallthru
          _
      $region60: #{tpu_custom_call.1} parent=5 // pred_fallthru
        _
    $region6: #{tpu_custom_call.1} parent=1 // loop_footer
      %s18 = sadd.s32 1, %s14
    $region7: #{tpu_custom_call.1} parent=1 // loop_footer_branch
      %13 = sbr.rel target = $region3
    $region8: #{tpu_custom_call.1} parent=1 // loop_exit
      _
    %437 = vsyncpa [#allocation4], 1
    %s438 = scalar_lea.sflag [#allocation4], 1
    %439 = vsyncpa %s438, 1

</llo_original>
